<compile_context>
chip_gen: v7x
topology: tpu7x:2x2x1
jax: 0.10.0
libtpu: 0.0.40
codegen_flags: <defaults>
</compile_context>

<pallas_src>
import jax
import jax.numpy as jnp
from jax.experimental import pallas as pl
from jax.experimental.pallas import tpu as pltpu

# Projector hyper-parameters (deterministic, synthetic).
EPS = 0.1        # Linf ball radius
MIN_VAL = 0.0    # valid pixel range lower bound
MAX_VAL = 1.0    # valid pixel range upper bound

# ~1 MiB per input block.  With 2 inputs + 1 output, each double-buffered,
# peak VMEM is ~6 MiB -> safe under default scoped VMEM on v5e/v6e/v7x.
_TARGET_BLOCK_BYTES = 1 << 20


def _project_kernel(pert_ref, inp_ref, out_ref):
    """Elementwise projection of the perturbation parameter (VPU, memory-bound)."""
    p = pert_ref[...]
    x = inp_ref[...]
    # Linf projection.
    p = jnp.clip(p, -EPS, EPS)
    # Additive-range projection: ensure (x + p) stays within [MIN_VAL, MAX_VAL].
    p = jnp.clip(p, MIN_VAL - x, MAX_VAL - x)
    out_ref[...] = p


def _pick_2d_layout(total_elems, itemsize):
    """Choose a lane-dense (rows, cols, tile_rows) flattening.

    Returns None if `total_elems` is not a multiple of 128 (caller falls back
    to the pure-jnp projector).
    """
    for cols in (8192, 4096, 2048, 1024, 512, 256, 128):
        if total_elems % cols == 0:
            break
    else:
        return None
    rows = total_elems // cols

    tile_r = max(1, _TARGET_BLOCK_BYTES // (cols * itemsize))
    if tile_r >= rows:
        tile_r = rows                      # full extent: always legal
    else:
        tile_r = max(8, (tile_r // 8) * 8)  # sublane-aligned
        tile_r = min(tile_r, rows)          # if rows < 8 this collapses to full extent
    return rows, cols, tile_r


def _project_pallas(pert2d, inp2d, tile_r):
    rows, cols = pert2d.shape
    grid = (pl.cdiv(rows, tile_r),)
    return pl.pallas_call(
        _project_kernel,
        out_shape=jax.ShapeDtypeStruct((rows, cols), pert2d.dtype),
        grid=grid,
        in_specs=[
            pl.BlockSpec((tile_r, cols), lambda i: (i, 0)),
            pl.BlockSpec((tile_r, cols), lambda i: (i, 0)),
        ],
        out_specs=pl.BlockSpec((tile_r, cols), lambda i: (i, 0)),
        # Projected perturbation overwrites the perturbation buffer in place,
        # matching PyTorch's in-place mutation of perturbation.data.
        input_output_aliases={0: 0},
        compiler_params=pltpu.CompilerParams(
            dimension_semantics=("parallel",),
        ),
    )(pert2d, inp2d)


class Perturber:
    """JAX/Pallas port of mart.attack.perturber.Perturber (forward pass)."""

    def __init__(self, initializer, gradient_modifier=None, projector=None,
                 min_pallas_bytes=0):
        self.initializer = initializer
        self.gradient_modifier = gradient_modifier  # backward-only; no fwd compute
        self.projector = projector
        self.perturbation = None  # lazy (UninitializedParameter analogue)
        # Below this many bytes, skip the Pallas launch and let XLA fuse the
        # two clips into the surrounding graph for free.
        self.min_pallas_bytes = min_pallas_bytes

    def initialize_parameters(self, input, target):
        assert self.perturbation is None, "already initialized"
        self.perturbation = self.initializer(input.shape, input.dtype)
        # TODO(synk): gradient_modifier is a grad hook; attach via jax.custom_vjp
        # if training semantics are needed (no forward-pass compute).
        # TODO(synk): the first-call initializer could be fused into the
        # projection kernel with pltpu.prng_seed/prng_random_bits to save one
        # full HBM round-trip; kept separate so arbitrary user initializers work.

    def __call__(self, input, target):
        if self.perturbation is None:
            self.initialize_parameters(input, target)

        if self.projector is None:
            # forward() returns the parameter itself; no copy kernel needed.
            return self.perturbation

        pert = self.perturbation
        shape = pert.shape
        total = pert.size
        nbytes = total * pert.dtype.itemsize
        layout = _pick_2d_layout(total, pert.dtype.itemsize)

        if layout is None or nbytes < self.min_pallas_bytes:
            # Tiny or awkwardly-sized tensors: pure-jnp projection.
            projected = self.projector(pert, input, target)
        else:
            rows, cols, tile_r = layout
            out2d = _project_pallas(
                pert.reshape(rows, cols), input.reshape(rows, cols), tile_r
            )
            projected = out2d.reshape(shape)

        # The forward-pre-hook mutates perturbation.data in place in PyTorch.
        self.perturbation = projected
        return projected


def uniform_initializer(shape, dtype):
    """Deterministic stand-in for MART's UniformInitializer(-EPS, EPS)."""
    key = jax.random.PRNGKey(0)
    return jax.random.uniform(key, shape, dtype=dtype, minval=-EPS, maxval=EPS)


def linf_additive_range_projector(perturbation, input, target):
    """Reference (pure-jnp) projector, also used for correctness checking."""
    p = jnp.clip(perturbation, -EPS, EPS)
    p = jnp.clip(p, MIN_VAL - input, MAX_VAL - input)
    return p


if __name__ == "__main__":
    # Small NCHW input consistent with an image-perturbation use case.
    B, C, H, W = 2, 4, 16, 16
    key = jax.random.PRNGKey(0)
    k_in, _ = jax.random.split(key)
    x = jax.random.uniform(k_in, (B, C, H, W), dtype=jnp.float32)  # "image" in [0,1]
    target = jnp.zeros((B,), dtype=jnp.int32)  # unused by forward; API parity

    # min_pallas_bytes=0 forces the Pallas path even at this tiny demo size
    # (in production you would leave a ~1 MiB threshold).
    perturber = Perturber(
        initializer=uniform_initializer,
        gradient_modifier=None,
        projector=linf_additive_range_projector,
        min_pallas_bytes=0,
    )

    out = perturber(x, target)
    out = jax.block_until_ready(out)

    # Sanity checks against the pure-JAX reference of the forward semantics.
    ref_pert = uniform_initializer((B, C, H, W), jnp.float32)
    ref_out = linf_additive_range_projector(ref_pert, x, target)
    assert out.shape == x.shape and out.dtype == x.dtype
    assert jnp.allclose(out, ref_out, atol=1e-6)
    # Parameter was updated in place (hook semantics).
    assert jnp.allclose(perturber.perturbation, ref_out, atol=1e-6)

    # projector=None path: returns the parameter with no kernel launch.
    perturber_noproj = Perturber(initializer=uniform_initializer)
    out2 = jax.block_until_ready(perturber_noproj(x, target))
    assert jnp.allclose(out2, ref_pert, atol=1e-6)

    print("KERNEL_OK")
</pallas_src>

<mosaic_0001>
module attributes {stable_mosaic.version = 11 : i64} {
  func.func @_project_kernel(%arg0: i32, %arg1: memref<1x2048xf32, #tpu.memory_space<vmem>>, %arg2: memref<1x2048xf32, #tpu.memory_space<vmem>>, %arg3: memref<1x2048xf32, #tpu.memory_space<vmem>>) attributes {dimension_semantics = [#tpu.dimension_semantics<parallel>], iteration_bounds = array<i64: 1>, scalar_prefetch = 0 : i64, scratch_operands = 0 : i64, tpu.core_type = #tpu.core_type<tc>, window_params = [{transform_indices = @transform_0, window_bounds = array<i64: 1, 2048>}, {transform_indices = @transform_1, window_bounds = array<i64: 1, 2048>}, {transform_indices = @transform_2, window_bounds = array<i64: 1, 2048>}]} {
    %c0 = arith.constant 0 : index
    %c0_0 = arith.constant 0 : index
    %0 = vector.load %arg1[%c0, %c0_0] : memref<1x2048xf32, #tpu.memory_space<vmem>>, vector<1x2048xf32>
    %c0_1 = arith.constant 0 : index
    %c0_2 = arith.constant 0 : index
    %1 = vector.load %arg2[%c0_1, %c0_2] : memref<1x2048xf32, #tpu.memory_space<vmem>>, vector<1x2048xf32>
    %cst = arith.constant -1.000000e-01 : f32
    %cst_3 = arith.constant 1.000000e-01 : f32
    %2 = vector.broadcast %cst : f32 to vector<1x2048xf32>
    %3 = arith.maximumf %2, %0 : vector<1x2048xf32>
    %4 = vector.broadcast %cst_3 : f32 to vector<1x2048xf32>
    %5 = arith.minimumf %4, %3 : vector<1x2048xf32>
    %cst_4 = arith.constant 0.000000e+00 : f32
    %6 = vector.broadcast %cst_4 : f32 to vector<1x2048xf32>
    %7 = arith.subf %6, %1 : vector<1x2048xf32>
    %cst_5 = arith.constant 1.000000e+00 : f32
    %8 = vector.broadcast %cst_5 : f32 to vector<1x2048xf32>
    %9 = arith.subf %8, %1 : vector<1x2048xf32>
    %10 = arith.maximumf %7, %5 : vector<1x2048xf32>
    %11 = arith.minimumf %9, %10 : vector<1x2048xf32>
    %c0_6 = arith.constant 0 : index
    %c0_7 = arith.constant 0 : index
    %12 = vector.load %arg3[%c0_6, %c0_7] : memref<1x2048xf32, #tpu.memory_space<vmem>>, vector<1x2048xf32>
    tpu.vector_store %arg3[%c0_6, %c0_7], %11 {strides = array<i32>} : memref<1x2048xf32, #tpu.memory_space<vmem>>, vector<1x2048xf32>,
    return
  }
  func.func @transform_0(%arg0: i32) -> (i32, i32) {
    %c0_i32 = arith.constant 0 : i32
    %c0_i32_0 = arith.constant 0 : i32
    return %arg0, %c0_i32 : i32, i32
  }
  func.func @transform_1(%arg0: i32) -> (i32, i32) {
    %c0_i32 = arith.constant 0 : i32
    %c0_i32_0 = arith.constant 0 : i32
    return %arg0, %c0_i32 : i32, i32
  }
  func.func @transform_2(%arg0: i32) -> (i32, i32) {
    %c0_i32 = arith.constant 0 : i32
    %c0_i32_0 = arith.constant 0 : i32
    return %arg0, %c0_i32 : i32, i32
  }
}

</mosaic_0001>

<llo_original>
// kernel: tpu_custom_call.1
$region0: #{tpu_custom_call.1}
  #allocation0 [shape = 'u32[]', space=smem, size = 0x4, offset = 0x4, fixed_abs, tag = 'smem constant byte address 0x4 - core index']
  #allocation1 [shape = 'u32[144,128]{1,0:T(1,128)}', space=vmem, size = 0x12000, scoped, tag = 'internal scratch']
  %s0 = inlined_call_operand.hbm [shape: f32[1,2048], index: 0, kind: input, shape index: {}, may-alias: {0,2}]
  %s1 = inlined_call_operand.vmem [shape: f32[1,2048], index: 1, kind: input, shape index: {}]
  %s2 = inlined_call_operand.hbm [shape: f32[1,2048], index: 2, kind: output, shape index: {}, may-alias: {0,2}]
  %s3 = sld [smem:[#allocation0]]
  $region22: #{tpu_custom_call.1} parent=0
    _
  %s5 = ssub.s32 1, %s3
  %s6 = scalar_select 0, %s5, %s3
  $region1: #{tpu_custom_call.1} parent=0
    #allocation2 [shape = 'u8[8192]{0}', space=vmem, size = 0x2000, scoped, tag = 'input window, operand 0, single buffered']
    #allocation3 [shape = 's32[1]{0}', space=sflag, size = 0x4, scoped, tag = 'scoped memory for tpu_custom_call.1']
    #allocation4 [shape = 's32[1]{0}', space=sflag, size = 0x4, scoped, tag = 'scoped memory for tpu_custom_call.1']
    #allocation5 [shape = 'u8[8192]{0}', space=vmem, size = 0x2000, scoped, tag = 'output window, operand 0, single buffered']
    %7 = vsyncpa [#allocation3], 0
    %8 = vsyncpa [#allocation4], 0
    // Predicated region
    $region2: #{tpu_custom_call.1} parent=1 // pred_check
      _
    $region3: #{tpu_custom_call.1} parent=1 // pred_check_branch
      %10 = sbr.rel (0) target = $region5
    $region4: #{tpu_custom_call.1} parent=1 // pred_region
      %s12 = ssub.s32 256, 256
      %13 = vsyncadd [#allocation3], %s12
      %s15 = sshll.u32 [#allocation2], 4
      %s16 = int_to_ptr.vmem [resolvable:$true] %s15
      %18 = dma.hbm_to_vmem [thread:$0]  %s0, 256, %s16, [#allocation3]
    $region5: #{tpu_custom_call.1} parent=1 // pred_fallthru
      _
    // Predicated region
    $region6: #{tpu_custom_call.1} parent=1 // pred_check
      _
    $region7: #{tpu_custom_call.1} parent=1 // pred_check_branch
      %20 = sbr.rel (0) target = $region9
    $region8: #{tpu_custom_call.1} parent=1 // pred_region
      _
    $region9: #{tpu_custom_call.1} parent=1 // pred_fallthru
      _
    // Predicated region
    $region10: #{tpu_custom_call.1} parent=1 // pred_check
      _
    $region11: #{tpu_custom_call.1} parent=1 // pred_check_branch
      %22 = sbr.rel (0) target = $region13
    $region12: #{tpu_custom_call.1} parent=1 // pred_region
      %23 = dma.done [#allocation3], 256
    $region13: #{tpu_custom_call.1} parent=1 // pred_fallthru
      _
    %v24 = vld [vmem:[#allocation2] sm:$0xff]
    %v25 = vld [vmem:[#allocation2 + $0x8] sm:$0xff]
    %v26 = vld [vmem:[%s1] sm:$0xff]
    %v27 = vld [vmem:[%s1 + $0x8] sm:$0xff]
    %v28 = vmax.f32 %v24, -0.1
    %v29 = vmax.f32 %v25, -0.1
    %v30 = vmin.f32 %v28, 0.1
    %v31 = vmin.f32 %v29, 0.1
    %v32 = vsub.f32 0.0, %v26
    %v33 = vsub.f32 0.0, %v27
    %v34 = vsub.f32 1.0, %v26
    %v35 = vsub.f32 1.0, %v27
    %v36 = vmax.f32 %v32, %v30
    %v37 = vmax.f32 %v33, %v31
    %v38 = vmin.f32 %v34, %v36
    %v39 = vmin.f32 %v35, %v37
    %40 = vst [vmem:[#allocation5] sm:$0xff] %v38
    %41 = vst [vmem:[#allocation5 + $0x8] sm:$0xff] %v39
    // Predicated region
    $region14: #{tpu_custom_call.1} parent=1 // pred_check
      _
    $region15: #{tpu_custom_call.1} parent=1 // pred_check_branch
      %43 = sbr.rel (0) target = $region17
    $region16: #{tpu_custom_call.1} parent=1 // pred_region
      %s45 = ssub.s32 256, 256
      %46 = vsyncadd [#allocation4], %s45
      %s48 = sshll.u32 [#allocation5], 4
      %s49 = int_to_ptr.vmem [resolvable:$true] %s48
      %51 = dma.vmem_to_hbm [thread:$0]  %s49, 256, %s2, [#allocation4]
    $region17: #{tpu_custom_call.1} parent=1 // pred_fallthru
      _
    // Predicated region
    $region18: #{tpu_custom_call.1} parent=1 // pred_check
      _
    $region19: #{tpu_custom_call.1} parent=1 // pred_check_branch
      %53 = sbr.rel (0) target = $region21
    $region20: #{tpu_custom_call.1} parent=1 // pred_region
      %54 = dma.done [#allocation4], 256
    $region21: #{tpu_custom_call.1} parent=1 // pred_fallthru
      _
    %55 = vsyncpa [#allocation3], 1
    %56 = vsyncpa [#allocation4], 1

</llo_original>
